<compile_context>
chip_gen: v7x
topology: tpu7x:2x2x1
jax: 0.10.0
libtpu: 0.0.40
codegen_flags: <defaults>
</compile_context>

<pallas_src>
import jax
import jax.numpy as jnp
from jax.experimental import pallas as pl
from jax.experimental.pallas import tpu as pltpu

NUM_HEADS = 12
HEAD_DIM = 64
HIDDEN = NUM_HEADS * HEAD_DIM  # 768


def _hbm_copy_kernel(x_hbm, o_hbm, sem):
    # One direct HBM->HBM DMA for the whole tensor: no VMEM staging, no vreg
    # traffic, single DMA-engine transfer at the HBM roofline.
    cp = pltpu.make_async_copy(x_hbm, o_hbm, sem)
    cp.start()
    cp.wait()


def view_as_heads(x252, x256):
    """Implements M.forward(x256, x252): x252.view(tuple(x256) + (12, 64))."""
    x257 = tuple(x256) + (NUM_HEADS, HEAD_DIM)
    b, s = x256
    assert x252.shape == (b, s, HIDDEN)

    bytes_accessed = 2 * b * s * HIDDEN * x252.dtype.itemsize

    out3d = pl.pallas_call(
        _hbm_copy_kernel,
        out_shape=jax.ShapeDtypeStruct((b, s, HIDDEN), x252.dtype),
        # Raw HBM refs on both sides: the kernel moves bytes with one DMA.
        in_specs=[pl.BlockSpec(memory_space=pl.ANY)],
        out_specs=pl.BlockSpec(memory_space=pl.ANY),
        scratch_shapes=[pltpu.SemaphoreType.DMA],
        cost_estimate=pl.CostEstimate(
            flops=0, transcendentals=0, bytes_accessed=bytes_accessed),
        compiler_params=pltpu.CompilerParams(has_side_effects=True),
    )(x252)

    # Metadata-only split of H=768 into (12, 64) outside the kernel; this is
    # the .view() itself and costs nothing.
    return out3d.reshape(x257)


if __name__ == "__main__":
    key = jax.random.PRNGKey(0)
    B, S = 1, 384  # shapes implied by the module: x256 = (1, 384)
    x256 = (B, S)
    x252 = jax.random.normal(key, (B, S, HIDDEN), dtype=jnp.float32)

    x258 = view_as_heads(x252, x256)
    jax.block_until_ready(x258)

    # Correctness check against plain-JAX reshape (== torch .view semantics).
    ref = x252.reshape(x256 + (NUM_HEADS, HEAD_DIM))
    assert x258.shape == (B, S, NUM_HEADS, HEAD_DIM)
    assert x258.dtype == x252.dtype
    assert bool(jnp.array_equal(x258, ref))

    print("KERNEL_OK")
</pallas_src>

<mosaic_0001>
module attributes {stable_mosaic.version = 11 : i64} {
  func.func @_hbm_copy_kernel(%arg0: memref<1x384x768xf32, #tpu.memory_space<any>>, %arg1: memref<1x384x768xf32, #tpu.memory_space<any>>, %arg2: memref<!tpu.dma_semaphore, #tpu.memory_space<semaphore_mem>>) attributes {dimension_semantics = [], scalar_prefetch = 0 : i64, scratch_operands = 1 : i64, tpu.core_type = #tpu.core_type<tc>} {
    tpu.enqueue_dma source(%arg0 : memref<1x384x768xf32, #tpu.memory_space<any>>) target(%arg1 : memref<1x384x768xf32, #tpu.memory_space<any>>) target_semaphore(%arg2 : memref<!tpu.dma_semaphore, #tpu.memory_space<semaphore_mem>>)
    tpu.wait_dma2 semaphore(%arg2 : memref<!tpu.dma_semaphore, #tpu.memory_space<semaphore_mem>>) src(%arg0 : memref<1x384x768xf32, #tpu.memory_space<any>>) dst(%arg1 : memref<1x384x768xf32, #tpu.memory_space<any>>)
    return
  }
}

</mosaic_0001>

<llo_original>
// kernel: tpu_custom_call.1
$region0: #{tpu_custom_call.1}
  #allocation0 [shape = 'u32[]', space=smem, size = 0x4, offset = 0x4, fixed_abs, tag = 'smem constant byte address 0x4 - core index']
  #allocation1 [shape = 'u32[144,128]{1,0:T(1,128)}', space=vmem, size = 0x12000, scoped, tag = 'internal scratch']
  #allocation2 [shape = 's32[1]{0}', space=sflag, size = 0x4, scoped, tag = 'scratch operand']
  #allocation3 [shape = 's32[]', space=sflag, size = 0x4, offset = 0, fixed_abs, tag = 'sflag constant byte address 0x0 - dummy sync flag']
  #allocation4 [shape = 'u32[0]{0}', space=smem, size = 0, offset = 0, fixed_abs, tag = 'smem constant byte address 0x0 - null']
  %s0 = inlined_call_operand.hbm [shape: f32[1,384,768], index: 0, kind: input, shape index: {}]
  %s1 = inlined_call_operand.hbm [shape: f32[1,384,768], index: 1, kind: output, shape index: {}]
  %s2 = sld [smem:[#allocation0]]
  $region2: #{tpu_custom_call.1} parent=0
    _
  %s4 = ssub.s32 1, %s2
  %s5 = scalar_select 0, %s4, %s2
  %s7 = sshll.u32 1, 14
  %s8 = sxor.u32 4294967295, %s7
  %s11 = sshll.u32 3, 24
  %s12 = sxor.u32 4294967295, %s11
  %s13 = sand.u32 0, %s12
  %s15 = sor.u32 %s13, 0
  %18 = dma.general %s0, 36864, %s1, [#allocation2], [#allocation3], [#allocation4], %s15, 0
  %s19 = smul.u32 8, 1
  %s20 = smul.u32 %s19, 48
  %s21 = smul.u32 %s20, 6
  %s22 = sshll.u32 %s21, 4
  %23 = dma.done [#allocation2], %s22
  %24 = vsyncmov [#allocation2]
  %s25 = vpop.sfrf %24
  %p26 = scmp.eq.s32.totalorder %s25, 0
  %p27 = pneg %p26
  %29 = shalt.err (%p27)

</llo_original>
